<compile_context>
chip_gen: v5e
topology: v5e:2x2
jax: 0.10.0
libtpu: 0.0.40
codegen_flags: <defaults>
</compile_context>

<pallas_src>
import functools
import math

import jax
import jax.numpy as jnp
from jax.experimental import pallas as pl
from jax.experimental.pallas import tpu as pltpu

VMEM_SPEC = pl.BlockSpec(memory_space=pltpu.MemorySpace.VMEM)


# ------------------------------ tiling helper --------------------------------

def _tile(dim, target, align):
    """Largest tile <= target that divides `dim` and is a multiple of `align`.
    Falls back to the full dim (always a legal Pallas block shape)."""
    if dim <= target:
        return dim
    t = (target // align) * align
    while t >= align:
        if dim % t == 0:
            return t
        t -= align
    return dim


# ------------------------------ Pallas kernels --------------------------------

def _linear_kernel(x_ref, w_ref, b_ref, o_ref, acc_ref, *, activation):
    """Tiled GEMM with K-accumulation: out = act(x @ w + b)."""
    @pl.when(pl.program_id(2) == 0)
    def _():
        acc_ref[...] = jnp.zeros_like(acc_ref)

    acc_ref[...] += jnp.dot(x_ref[...], w_ref[...],
                            preferred_element_type=jnp.float32)

    @pl.when(pl.program_id(2) == pl.num_programs(2) - 1)
    def _():
        y = acc_ref[...] + b_ref[...]
        if activation == "gelu":
            # TODO(synk): HF BERT "gelu" is erf-based; tanh approximation used
            # here for robust Mosaic lowering of the transcendental.
            c = 0.7978845608028654  # sqrt(2/pi)
            y = 0.5 * y * (1.0 + jnp.tanh(c * (y + 0.044715 * y * y * y)))
        o_ref[...] = y.astype(o_ref.dtype)


def linear(x, w, b, activation="none", out_dtype=jnp.bfloat16):
    """x:[M,K] bf16 @ w:[K,N] bf16 + b:[N] f32 -> [M,N] (f32 accumulation)."""
    M, K = x.shape
    N = w.shape[1]
    tm = _tile(M, 256, 8)
    tn = _tile(N, 256, 128)
    tk = _tile(K, 512, 128)
    grid = (M // tm, N // tn, K // tk)
    kern = functools.partial(_linear_kernel, activation=activation)
    cost = pl.CostEstimate(
        flops=2 * M * N * K,
        transcendentals=M * N if activation == "gelu" else 0,
        bytes_accessed=2 * (M * K + K * N + M * N) + 4 * N,
    )
    return pl.pallas_call(
        kern,
        grid=grid,
        in_specs=[
            pl.BlockSpec((tm, tk), lambda i, j, k: (i, k)),
            pl.BlockSpec((tk, tn), lambda i, j, k: (k, j)),
            pl.BlockSpec((1, tn), lambda i, j, k: (0, j)),
        ],
        out_specs=pl.BlockSpec((tm, tn), lambda i, j, k: (i, j)),
        out_shape=jax.ShapeDtypeStruct((M, N), out_dtype),
        scratch_shapes=[pltpu.VMEM((tm, tn), jnp.float32)],
        compiler_params=pltpu.CompilerParams(
            dimension_semantics=("parallel", "parallel", "arbitrary")),
        cost_estimate=cost,
    )(x, w, b.reshape(1, N))


def _linear_res_ln_kernel(x_ref, w_ref, b_ref, res_ref, g_ref, bb_ref,
                          o_ref, acc_ref, *, eps):
    """out = LayerNorm(x @ w + b + residual): bias/residual/LN fused epilogue."""
    @pl.when(pl.program_id(1) == 0)
    def _():
        acc_ref[...] = jnp.zeros_like(acc_ref)

    acc_ref[...] += jnp.dot(x_ref[...], w_ref[...],
                            preferred_element_type=jnp.float32)

    @pl.when(pl.program_id(1) == pl.num_programs(1) - 1)
    def _():
        y = acc_ref[...] + b_ref[...] + res_ref[...].astype(jnp.float32)
        mu = jnp.mean(y, axis=-1, keepdims=True)
        var = jnp.mean((y - mu) * (y - mu), axis=-1, keepdims=True)
        o_ref[...] = ((y - mu) * jax.lax.rsqrt(var + eps) * g_ref[...]
                      + bb_ref[...]).astype(o_ref.dtype)


def linear_residual_ln(x, w, b, residual, gamma, beta, eps=1e-12,
                       out_dtype=jnp.bfloat16):
    """Fused: LayerNorm(residual + (x @ w + b)).  N (=hidden) kept whole so the
    LN reduction lives entirely in the GEMM epilogue."""
    M, K = x.shape
    N = w.shape[1]
    tm = _tile(M, 256, 8)
    tk = _tile(K, 512, 128)
    grid = (M // tm, K // tk)
    kern = functools.partial(_linear_res_ln_kernel, eps=eps)
    cost = pl.CostEstimate(
        flops=2 * M * N * K + 8 * M * N,
        transcendentals=M,
        bytes_accessed=2 * (M * K + K * N + 2 * M * N) + 12 * N,
    )
    return pl.pallas_call(
        kern,
        grid=grid,
        in_specs=[
            pl.BlockSpec((tm, tk), lambda i, k: (i, k)),
            pl.BlockSpec((tk, N), lambda i, k: (k, 0)),
            pl.BlockSpec((1, N), lambda i, k: (0, 0)),
            pl.BlockSpec((tm, N), lambda i, k: (i, 0)),
            pl.BlockSpec((1, N), lambda i, k: (0, 0)),
            pl.BlockSpec((1, N), lambda i, k: (0, 0)),
        ],
        out_specs=pl.BlockSpec((tm, N), lambda i, k: (i, 0)),
        out_shape=jax.ShapeDtypeStruct((M, N), out_dtype),
        scratch_shapes=[pltpu.VMEM((tm, N), jnp.float32)],
        compiler_params=pltpu.CompilerParams(
            dimension_semantics=("parallel", "arbitrary")),
        cost_estimate=cost,
    )(x, w, b.reshape(1, N), residual, gamma.reshape(1, N), beta.reshape(1, N))


def _layernorm_kernel(x_ref, g_ref, b_ref, o_ref, *, eps):
    x = x_ref[...].astype(jnp.float32)
    mu = jnp.mean(x, axis=-1, keepdims=True)
    var = jnp.mean((x - mu) * (x - mu), axis=-1, keepdims=True)
    o_ref[...] = ((x - mu) * jax.lax.rsqrt(var + eps) * g_ref[...]
                  + b_ref[...]).astype(o_ref.dtype)


def layernorm(x, gamma, beta, eps=1e-12, out_dtype=jnp.bfloat16):
    """Row-tiled LayerNorm (memory-bound; gridded for DMA/compute pipelining)."""
    M, H = x.shape
    tm = _tile(M, 512, 8)
    kern = functools.partial(_layernorm_kernel, eps=eps)
    return pl.pallas_call(
        kern,
        grid=(M // tm,),
        in_specs=[
            pl.BlockSpec((tm, H), lambda i: (i, 0)),
            pl.BlockSpec((1, H), lambda i: (0, 0)),
            pl.BlockSpec((1, H), lambda i: (0, 0)),
        ],
        out_specs=pl.BlockSpec((tm, H), lambda i: (i, 0)),
        out_shape=jax.ShapeDtypeStruct((M, H), out_dtype),
        compiler_params=pltpu.CompilerParams(dimension_semantics=("parallel",)),
    )(x, gamma.reshape(1, H), beta.reshape(1, H))


def _attention_kernel(qkv_ref, o_ref, *, num_heads, head_dim, hidden, scale):
    """One batch element, all heads.  qkv_ref:[1,S,3H] bf16 -> o_ref:[1,S,H].
    Heads are sliced in-kernel so no HBM head transposes are needed; the output
    block stays lane-dense ([S, H])."""
    for h in range(num_heads):                       # static unroll over heads
        lo = h * head_dim
        q = qkv_ref[0, :, lo:lo + head_dim] * scale  # fold 1/sqrt(dH) into q
        k = qkv_ref[0, :, hidden + lo:hidden + lo + head_dim]
        v = qkv_ref[0, :, 2 * hidden + lo:2 * hidden + lo + head_dim]
        # Contract the head_dim axes directly (no explicit k.T relayout).
        s = jax.lax.dot_general(q, k, (((1,), (1,)), ((), ())),
                                preferred_element_type=jnp.float32)
        s = s - jnp.max(s, axis=-1, keepdims=True)
        p = jnp.exp(s)
        p = p * pl.reciprocal(jnp.sum(p, axis=-1, keepdims=True), approx=True)
        ctx = jnp.dot(p.astype(v.dtype), v, preferred_element_type=jnp.float32)
        o_ref[0, :, lo:lo + head_dim] = ctx.astype(o_ref.dtype)


def attention(qkv, num_heads, head_dim, hidden):
    """qkv: [B, S, 3H] bf16 (Q|K|V along last axis) -> context [B, S, H] bf16."""
    B, S, threeH = qkv.shape
    kern = functools.partial(_attention_kernel, num_heads=num_heads,
                             head_dim=head_dim, hidden=hidden,
                             scale=1.0 / math.sqrt(head_dim))
    # TODO(synk): attention_mask is not applied (all-ones mask assumed).
    # TODO(synk): for long sequences, switch to a q/kv-tiled flash-style kernel
    # so the [S,S] score matrix never materializes in VMEM.
    return pl.pallas_call(
        kern,
        grid=(B,),
        in_specs=[pl.BlockSpec((1, S, threeH), lambda b: (b, 0, 0))],
        out_specs=pl.BlockSpec((1, S, hidden), lambda b: (b, 0, 0)),
        out_shape=jax.ShapeDtypeStruct((B, S, hidden), jnp.bfloat16),
        compiler_params=pltpu.CompilerParams(dimension_semantics=("parallel",)),
    )(qkv)


def _pool_cls_kernel(cls_ref, pw_ref, pb_ref, cw_ref, cb_ref, o_ref):
    """Fused BERT pooler + classifier: Linear(tanh(Linear(cls)))."""
    pooled = jnp.dot(cls_ref[...], pw_ref[...],
                     preferred_element_type=jnp.float32) + pb_ref[...]
    pooled = jnp.tanh(pooled)
    o_ref[...] = (jnp.dot(pooled.astype(cw_ref.dtype), cw_ref[...],
                          preferred_element_type=jnp.float32) + cb_ref[...])


def pool_classify(cls_tok, pool_w, pool_b, cls_w, cls_b):
    B, H = cls_tok.shape
    return pl.pallas_call(
        _pool_cls_kernel,
        in_specs=[VMEM_SPEC] * 5,
        out_specs=VMEM_SPEC,
        out_shape=jax.ShapeDtypeStruct((B, 1), jnp.float32),
    )(cls_tok, pool_w, pool_b.reshape(1, H), cls_w, cls_b.reshape(1, 1))


# ------------------------------ model definition ------------------------------

def init_params(key, cfg):
    H, I = cfg["hidden"], cfg["intermediate"]
    scale = 0.02

    def dense(k, fan_in, fan_out):
        kw, _ = jax.random.split(k)
        return (scale * jax.random.normal(kw, (fan_in, fan_out), jnp.float32),
                jnp.zeros((fan_out,), jnp.float32))

    keys = jax.random.split(key, 8 + cfg["layers"])
    params = {
        "word_emb": scale * jax.random.normal(keys[0], (cfg["vocab"], H), jnp.float32),
        "pos_emb": scale * jax.random.normal(keys[1], (cfg["max_pos"], H), jnp.float32),
        "type_emb": scale * jax.random.normal(keys[2], (cfg["type_vocab"], H), jnp.float32),
        "emb_ln_g": jnp.ones((H,), jnp.float32),
        "emb_ln_b": jnp.zeros((H,), jnp.float32),
        "layers": [],
    }
    for li in range(cfg["layers"]):
        lk = jax.random.split(keys[8 + li], 6)
        wq, bq = dense(lk[0], H, H)
        wk, bk = dense(lk[1], H, H)
        wv, bv = dense(lk[2], H, H)
        wo, bo = dense(lk[3], H, H)
        w1, b1 = dense(lk[4], H, I)
        w2, b2 = dense(lk[5], I, H)
        params["layers"].append({
            # Fused Q|K|V projection weight [H, 3H]; bf16 operands for the MXU.
            "wqkv": jnp.concatenate([wq, wk, wv], axis=1).astype(jnp.bfloat16),
            "bqkv": jnp.concatenate([bq, bk, bv], axis=0),
            "wo": wo.astype(jnp.bfloat16), "bo": bo,
            "w1": w1.astype(jnp.bfloat16), "b1": b1,
            "w2": w2.astype(jnp.bfloat16), "b2": b2,
            "ln1_g": jnp.ones((H,), jnp.float32), "ln1_b": jnp.zeros((H,), jnp.float32),
            "ln2_g": jnp.ones((H,), jnp.float32), "ln2_b": jnp.zeros((H,), jnp.float32),
        })
    pw, pb = dense(keys[3], H, H)
    cw, cb = dense(keys[4], H, 1)
    params.update({"pool_w": pw.astype(jnp.bfloat16), "pool_b": pb,
                   "cls_w": cw.astype(jnp.bfloat16), "cls_b": cb})
    return params


def bert_classifier_forward(params, input_ids, token_type_ids, cfg):
    B, S = input_ids.shape
    H, nH = cfg["hidden"], cfg["heads"]
    dH = H // nH

    # Embeddings (gathers are plain-JAX glue), then row-tiled Pallas LayerNorm
    # which also casts hidden states to bf16 for the matmul path.
    pos_ids = jnp.arange(S, dtype=jnp.int32)
    emb = (jnp.take(params["word_emb"], input_ids, axis=0)
           + jnp.take(params["pos_emb"], pos_ids, axis=0)[None, :, :]
           + jnp.take(params["type_emb"], token_type_ids, axis=0))
    h = layernorm(emb.reshape(B * S, H), params["emb_ln_g"], params["emb_ln_b"])

    for lyr in params["layers"]:
        # One fused QKV GEMM instead of three projections.
        qkv = linear(h, lyr["wqkv"], lyr["bqkv"])                 # [B*S, 3H] bf16
        # Per-batch attention; per-head slicing happens inside the kernel so no
        # split_heads / merge_heads HBM transposes are needed.
        ctx = attention(qkv.reshape(B, S, 3 * H), nH, dH, H)      # [B, S, H] bf16
        # Output projection with fused bias + residual + LayerNorm epilogue.
        h = linear_residual_ln(ctx.reshape(B * S, H), lyr["wo"], lyr["bo"],
                               h, lyr["ln1_g"], lyr["ln1_b"])
        # FFN: GEMM + GELU, then GEMM with fused bias + residual + LayerNorm.
        inter = linear(h, lyr["w1"], lyr["b1"], activation="gelu")
        h = linear_residual_ln(inter, lyr["w2"], lyr["b2"],
                               h, lyr["ln2_g"], lyr["ln2_b"])

    # BERT pooler + classifier fused: logits = Linear(tanh(Linear(h[CLS]))).
    cls_tok = h.reshape(B, S, H)[:, 0, :]
    logits = pool_classify(cls_tok, params["pool_w"], params["pool_b"],
                           params["cls_w"], params["cls_b"])
    return logits  # [B, 1] f32


# ------------------------------------ main ------------------------------------

if __name__ == "__main__":
    cfg = dict(vocab=64, hidden=32, heads=4, intermediate=64,
               layers=2, max_pos=16, type_vocab=2)
    B, S = 2, 8

    key = jax.random.PRNGKey(0)
    kp, kid = jax.random.split(key)
    params = init_params(kp, cfg)
    input_ids = jax.random.randint(kid, (B, S), 0, cfg["vocab"], dtype=jnp.int32)
    token_type_ids = jnp.zeros((B, S), dtype=jnp.int32)

    logits = bert_classifier_forward(params, input_ids, token_type_ids, cfg)
    logits = jax.block_until_ready(logits)
    assert logits.shape == (B, 1) and logits.dtype == jnp.float32
    print("KERNEL_OK")
</pallas_src>

<mosaic_0001>
module attributes {stable_mosaic.version = 11 : i64} {
  func.func @_layernorm_kernel(%arg0: i32, %arg1: memref<16x32xf32, #tpu.memory_space<vmem>>, %arg2: memref<1x32xf32, #tpu.memory_space<vmem>>, %arg3: memref<1x32xf32, #tpu.memory_space<vmem>>, %arg4: memref<16x32xbf16, #tpu.memory_space<vmem>>) attributes {dimension_semantics = [#tpu.dimension_semantics<parallel>], iteration_bounds = array<i64: 1>, scalar_prefetch = 0 : i64, scratch_operands = 0 : i64, tpu.core_type = #tpu.core_type<tc>, window_params = [{transform_indices = @transform_0, window_bounds = array<i64: 16, 32>}, {pipeline_mode = #tpu.pipeline_mode<synchronous>, transform_indices = @transform_1, window_bounds = array<i64: 1, 32>}, {pipeline_mode = #tpu.pipeline_mode<synchronous>, transform_indices = @transform_2, window_bounds = array<i64: 1, 32>}, {transform_indices = @transform_3, window_bounds = array<i64: 16, 32>}]} {
    %c0 = arith.constant 0 : index
    %c0_0 = arith.constant 0 : index
    %0 = vector.load %arg1[%c0, %c0_0] : memref<16x32xf32, #tpu.memory_space<vmem>>, vector<16x32xf32>
    %cst = arith.constant dense<0.000000e+00> : vector<16xf32>
    %1 = vector.multi_reduction <add>, %0, %cst [1] : vector<16x32xf32> to vector<16xf32>
    %2 = vector.shape_cast %1 : vector<16xf32> to vector<16x1xf32>
    %cst_1 = arith.constant 3.200000e+01 : f32
    %3 = vector.broadcast %cst_1 : f32 to vector<16x1xf32>
    %4 = arith.divf %2, %3 : vector<16x1xf32>
    %5 = vector.broadcast %4 : vector<16x1xf32> to vector<16x32xf32>
    %6 = arith.subf %0, %5 : vector<16x32xf32>
    %7 = vector.broadcast %4 : vector<16x1xf32> to vector<16x32xf32>
    %8 = arith.subf %0, %7 : vector<16x32xf32>
    %9 = arith.mulf %6, %8 : vector<16x32xf32>
    %cst_2 = arith.constant dense<0.000000e+00> : vector<16xf32>
    %10 = vector.multi_reduction <add>, %9, %cst_2 [1] : vector<16x32xf32> to vector<16xf32>
    %11 = vector.shape_cast %10 : vector<16xf32> to vector<16x1xf32>
    %cst_3 = arith.constant 3.200000e+01 : f32
    %12 = vector.broadcast %cst_3 : f32 to vector<16x1xf32>
    %13 = arith.divf %11, %12 : vector<16x1xf32>
    %14 = vector.broadcast %4 : vector<16x1xf32> to vector<16x32xf32>
    %15 = arith.subf %0, %14 : vector<16x32xf32>
    %cst_4 = arith.constant 9.99999996E-13 : f32
    %16 = vector.broadcast %cst_4 : f32 to vector<16x1xf32>
    %17 = arith.addf %13, %16 : vector<16x1xf32>
    %18 = math.rsqrt %17 : vector<16x1xf32>
    %19 = vector.broadcast %18 : vector<16x1xf32> to vector<16x32xf32>
    %20 = arith.mulf %15, %19 : vector<16x32xf32>
    %c0_5 = arith.constant 0 : index
    %c0_6 = arith.constant 0 : index
    %21 = vector.load %arg2[%c0_5, %c0_6] : memref<1x32xf32, #tpu.memory_space<vmem>>, vector<1x32xf32>
    %22 = vector.broadcast %21 : vector<1x32xf32> to vector<16x32xf32>
    %23 = arith.mulf %20, %22 : vector<16x32xf32>
    %c0_7 = arith.constant 0 : index
    %c0_8 = arith.constant 0 : index
    %24 = vector.load %arg3[%c0_7, %c0_8] : memref<1x32xf32, #tpu.memory_space<vmem>>, vector<1x32xf32>
    %25 = vector.broadcast %24 : vector<1x32xf32> to vector<16x32xf32>
    %26 = arith.addf %23, %25 : vector<16x32xf32>
    %27 = arith.truncf %26 : vector<16x32xf32> to vector<16x32xbf16>
    %c0_9 = arith.constant 0 : index
    %c0_10 = arith.constant 0 : index
    %28 = vector.load %arg4[%c0_9, %c0_10] : memref<16x32xbf16, #tpu.memory_space<vmem>>, vector<16x32xbf16>
    tpu.vector_store %arg4[%c0_9, %c0_10], %27 {strides = array<i32>} : memref<16x32xbf16, #tpu.memory_space<vmem>>, vector<16x32xbf16>,
    return
  }
  func.func @transform_0(%arg0: i32) -> (i32, i32) {
    %c0_i32 = arith.constant 0 : i32
    %c0_i32_0 = arith.constant 0 : i32
    return %arg0, %c0_i32 : i32, i32
  }
  func.func @transform_1(%arg0: i32) -> (i32, i32) {
    %c0_i32 = arith.constant 0 : i32
    %c0_i32_0 = arith.constant 0 : i32
    %c0_i32_1 = arith.constant 0 : i32
    return %c0_i32, %c0_i32_0 : i32, i32
  }
  func.func @transform_2(%arg0: i32) -> (i32, i32) {
    %c0_i32 = arith.constant 0 : i32
    %c0_i32_0 = arith.constant 0 : i32
    %c0_i32_1 = arith.constant 0 : i32
    return %c0_i32, %c0_i32_0 : i32, i32
  }
  func.func @transform_3(%arg0: i32) -> (i32, i32) {
    %c0_i32 = arith.constant 0 : i32
    %c0_i32_0 = arith.constant 0 : i32
    return %arg0, %c0_i32 : i32, i32
  }
}

</mosaic_0001>

<llo_original>
// kernel: tpu_custom_call.1
$region0: #{tpu_custom_call.1}
  #allocation0 [shape = 'u32[]', space=smem, size = 0x4, offset = 0x4, fixed_abs, tag = 'smem constant byte address 0x4 - core index']
  #allocation1 [shape = 'u32[72,128]{1,0:T(1,128)}', space=vmem, size = 0x9000, scoped, tag = 'internal scratch']
  %s0 = inlined_call_operand.hbm [shape: f32[16,32], index: 0, kind: input, shape index: {}]
  %s1 = inlined_call_operand.hbm [shape: f32[1,32], index: 1, kind: input, shape index: {}]
  %s2 = inlined_call_operand.vmem [shape: f32[1,32], index: 2, kind: input, shape index: {}]
  %s3 = inlined_call_operand.hbm [shape: bf16[16,32], index: 3, kind: output, shape index: {}]
  %s4 = sld [smem:[#allocation0]]
  $region30: #{tpu_custom_call.1} parent=0
    _
  %s6 = ssub.s32 1, %s4
  %s7 = scalar_select 0, %s6, %s4
  $region1: #{tpu_custom_call.1} parent=0
    #allocation2 [shape = 'u8[8192]{0}', space=vmem, size = 0x2000, scoped, tag = 'input window, operand 0, single buffered']
    #allocation3 [shape = 's32[1]{0}', space=sflag, size = 0x4, scoped, tag = 'scoped memory for tpu_custom_call.1']
    #allocation4 [shape = 's32[1]{0}', space=sflag, size = 0x4, scoped, tag = 'scoped memory for tpu_custom_call.1']
    #allocation5 [shape = 'u8[512]{0}', space=vmem, size = 0x400, scoped, tag = 'input window, operand 1, single buffered']
    #allocation6 [shape = 's32[1]{0}', space=sflag, size = 0x4, scoped, tag = 'scoped memory for tpu_custom_call.1']
    #allocation7 [shape = 'u8[4096]{0}', space=vmem, size = 0x1000, scoped, tag = 'output window, operand 0, single buffered']
    %8 = vsyncpa [#allocation3], 0
    %9 = vsyncpa [#allocation6], 0
    %10 = vsyncpa [#allocation4], 0
    // Predicated region
    $region2: #{tpu_custom_call.1} parent=1 // pred_check
      _
    $region3: #{tpu_custom_call.1} parent=1 // pred_check_branch
      %12 = sbr.rel (0) target = $region5
    $region4: #{tpu_custom_call.1} parent=1 // pred_region
      %14 = vsyncadd [#allocation3], 0
      %s15 = sshll.u32 %s0, 4
      %s16 = int_to_ptr.hbm [resolvable:$true] %s15
      %s17 = sshll.u32 [#allocation2], 4
      %s18 = int_to_ptr.vmem [resolvable:$true] %s17
      %23 = dma.hbm_to_vmem [thread:$0]  %s16, 256, %s18, [#allocation3], 128, 128, 8
    $region5: #{tpu_custom_call.1} parent=1 // pred_fallthru
      _
    // Predicated region
    $region6: #{tpu_custom_call.1} parent=1 // pred_check
      _
    $region7: #{tpu_custom_call.1} parent=1 // pred_check_branch
      %25 = sbr.rel (0) target = $region9
    $region8: #{tpu_custom_call.1} parent=1 // pred_region
      %27 = vsyncadd [#allocation6], 0
      %s29 = sshll.u32 %s1, 4
      %s30 = int_to_ptr.hbm [resolvable:$true] %s29
      %s31 = sshll.u32 [#allocation5], 4
      %s32 = int_to_ptr.vmem [resolvable:$true] %s31
      %34 = dma.hbm_to_vmem [thread:$0]  %s30, 16, %s32, [#allocation6]
    $region9: #{tpu_custom_call.1} parent=1 // pred_fallthru
      _
    // Predicated region
    $region10: #{tpu_custom_call.1} parent=1 // pred_check
      _
    $region11: #{tpu_custom_call.1} parent=1 // pred_check_branch
      %36 = sbr.rel (0) target = $region13
    $region12: #{tpu_custom_call.1} parent=1 // pred_region
      _
    $region13: #{tpu_custom_call.1} parent=1 // pred_fallthru
      _
    // Predicated region
    $region14: #{tpu_custom_call.1} parent=1 // pred_check
      _
    $region15: #{tpu_custom_call.1} parent=1 // pred_check_branch
      %38 = sbr.rel (0) target = $region17
    $region16: #{tpu_custom_call.1} parent=1 // pred_region
      %40 = dma.done [#allocation3], 256
    $region17: #{tpu_custom_call.1} parent=1 // pred_fallthru
      _
    // Predicated region
    $region18: #{tpu_custom_call.1} parent=1 // pred_check
      _
    $region19: #{tpu_custom_call.1} parent=1 // pred_check_branch
      %42 = sbr.rel (0) target = $region21
    $region20: #{tpu_custom_call.1} parent=1 // pred_region
      %44 = dma.done [#allocation6], 16
    $region21: #{tpu_custom_call.1} parent=1 // pred_fallthru
      _
    %v45 = vld [vmem:[#allocation2] sm:$0xff]
    %v46 = vld [vmem:[#allocation2 + $0x8] sm:$0xff]
    %vm47 = vcmask 261120
    %v48 = vsel %vm47, %v45, 0.0
    %49 = vadd.xlane.f32.xlu0 %v48
    %v50 = vpop.xlane.xlu0 %49
    %v51 = vsel %vm47, %v46, 0.0
    %52 = vadd.xlane.f32.xlu0 %v51
    %v53 = vpop.xlane.xlu0 %52
    %v54 = vrcp.pop 32.0
    %v55 = vmul.f32 32.0, %v54
    %v56 = vsub.f32 1.0, %v55
    %v57 = vmul.f32 %v54, %v56
    %v58 = vadd.f32 %v54, %v57
    %vm59 = vweird.f32 %v54
    %v60 = vsel %vm59, %v54, %v58
    %v61 = vmul.f32 %v50, %v60
    %v62 = vmul.f32 %v53, %v60
    %v63 = vsub.f32 %v45, %v61
    %v64 = vsub.f32 %v46, %v62
    %v65 = vmul.f32 %v63, %v63
    %v66 = vmul.f32 %v64, %v64
    %v67 = vsel %vm47, %v65, 0.0
    %68 = vadd.xlane.f32.xlu0 %v67
    %v69 = vpop.xlane.xlu0 %68
    %v70 = vsel %vm47, %v66, 0.0
    %71 = vadd.xlane.f32.xlu0 %v70
    %v72 = vpop.xlane.xlu0 %71
    %v73 = vmul.f32 %v69, %v60
    %v74 = vmul.f32 %v72, %v60
    %v75 = vadd.f32 %v73, 1e-12
    %v76 = vadd.f32 %v74, 1e-12
    %v77 = vrsqrt.pop %v75
    %v78 = vmul.f32 %v77, %v75
    %v79 = vmul.f32 %v78, %v77
    %v80 = vmul.f32 0.5, %v79
    %v81 = vsub.f32 1.5, %v80
    %v82 = vmul.f32 %v77, %v81
    %vm83 = vweird.f32 %v75
    %vm84 = vweird.f32 %v77
    %vm85 = vmor %vm83, %vm84
    %v86 = vsel %vm85, %v77, %v82
    %v87 = vrsqrt.pop %v76
    %v88 = vmul.f32 %v87, %v76
    %v89 = vmul.f32 %v88, %v87
    %v90 = vmul.f32 0.5, %v89
    %v91 = vsub.f32 1.5, %v90
    %v92 = vmul.f32 %v87, %v91
    %vm93 = vweird.f32 %v76
    %vm94 = vweird.f32 %v87
    %vm95 = vmor %vm93, %vm94
    %v96 = vsel %vm95, %v87, %v92
    %v97 = vmul.f32 %v63, %v86
    %v98 = vmul.f32 %v64, %v96
    %v99 = vld [vmem:[#allocation5] sm:$0x1]
    %v101 = vperm.slane %v99, 0
    %v103 = vmul.f32 %v97, %v101
    %v104 = vmul.f32 %v98, %v101
    %v105 = vld [vmem:[%s2] sm:$0x1]
    %v107 = vperm.slane %v105, 0
    %v109 = vadd.f32 %v103, %v107
    %v110 = vadd.f32 %v104, %v107
    %v111 = vpack.c.bf16 %v109, %v109
    %v112 = vpack.c.bf16 %v110, %v110
    %vm113 = vcmask 257024
    %114 = vst.msk [vmem:[#allocation7] sm:$0xf] %vm113, %v111
    %115 = vst.msk [vmem:[#allocation7 + $0x4] sm:$0xf] %vm113, %v112
    // Predicated region
    $region22: #{tpu_custom_call.1} parent=1 // pred_check
      _
    $region23: #{tpu_custom_call.1} parent=1 // pred_check_branch
      %117 = sbr.rel (0) target = $region25
    $region24: #{tpu_custom_call.1} parent=1 // pred_region
      %119 = vsyncadd [#allocation4], 0
      %s120 = sshll.u32 [#allocation7], 4
      %s121 = int_to_ptr.vmem [resolvable:$true] %s120
      %s122 = sshll.u32 %s3, 4
      %s123 = int_to_ptr.hbm [resolvable:$true] %s122
      %128 = dma.vmem_to_hbm [thread:$0]  %s121, 128, %s123, [#allocation4], 64, 64, 4
    $region25: #{tpu_custom_call.1} parent=1 // pred_fallthru
      _
    // Predicated region
    $region26: #{tpu_custom_call.1} parent=1 // pred_check
      _
    $region27: #{tpu_custom_call.1} parent=1 // pred_check_branch
      %130 = sbr.rel (0) target = $region29
    $region28: #{tpu_custom_call.1} parent=1 // pred_region
      %132 = dma.done [#allocation4], 128
    $region29: #{tpu_custom_call.1} parent=1 // pred_fallthru
      _
    %133 = vsyncpa [#allocation3], 1
    %134 = vsyncpa [#allocation6], 1
    %135 = vsyncpa [#allocation4], 1

</llo_original>
